<compile_context>
chip_gen: v7x
topology: tpu7x:2x2x1
jax: 0.10.0
libtpu: 0.0.40
codegen_flags: <defaults>
</compile_context>

<pallas_src>
from typing import NamedTuple

import jax
import jax.numpy as jnp
from jax.experimental import pallas as pl
from jax.experimental.pallas import tpu as pltpu

H1, H2 = 64, 32  # hidden sizes fixed by the PyTorch module


def _round_up(n: int, m: int) -> int:
    return ((n + m - 1) // m) * m


class ParamLayout(NamedTuple):
    state_dim: int
    action_dim: int
    a_pad: int        # action dim padded to a multiple of 128 (lane-dense out)
    cols: int         # slab lane width
    rows_total: int   # slab sublane height (multiple of 16 for bf16 tiling)
    rw1: int
    rb1: int
    rw2: int
    rb2: int
    rw3: int
    rb3: int


def init_dqn_params(key, state_dim, action_dim):
    """Synthetic init mimicking PyTorch nn.Linear default (U[-1/sqrt(fan_in), ...])."""
    dims = [(state_dim, H1), (H1, H2), (H2, action_dim)]
    params = []
    for fan_in, fan_out in dims:
        kw, kb, key = jax.random.split(key, 3)
        bound = 1.0 / jnp.sqrt(jnp.float32(fan_in))
        w = jax.random.uniform(kw, (fan_in, fan_out), jnp.float32, -bound, bound)
        b = jax.random.uniform(kb, (fan_out,), jnp.float32, -bound, bound)
        params += [w, b]
    return params


def pack_params(params, state_dim, action_dim, param_dtype=jnp.bfloat16):
    """Pack (w1,b1,w2,b2,w3,b3) into a single lane-dense slab.

    Row offsets are aligned to 16 (the bf16 sublane packing tile) so every
    in-kernel slice is layout-native.
    """
    w1, b1, w2, b2, w3, b3 = params
    a_pad = _round_up(max(action_dim, 128), 128)
    cols = a_pad  # >= 128 >= H1, H2
    ALIGN = 16    # bf16 native sublane tile

    rw1 = 0
    rb1 = _round_up(rw1 + state_dim, ALIGN)
    rw2 = _round_up(rb1 + 1, ALIGN)
    rb2 = _round_up(rw2 + H1, ALIGN)
    rw3 = _round_up(rb2 + 1, ALIGN)
    rb3 = _round_up(rw3 + H2, ALIGN)
    rows_total = _round_up(rb3 + 1, ALIGN)

    slab = jnp.zeros((rows_total, cols), jnp.float32)
    slab = slab.at[rw1:rw1 + state_dim, 0:H1].set(w1)
    slab = slab.at[rb1, 0:H1].set(b1)
    slab = slab.at[rw2:rw2 + H1, 0:H2].set(w2)
    slab = slab.at[rb2, 0:H2].set(b2)
    slab = slab.at[rw3:rw3 + H2, 0:action_dim].set(w3)   # padded cols stay exactly 0
    slab = slab.at[rb3, 0:action_dim].set(b3)

    layout = ParamLayout(state_dim, action_dim, a_pad, cols, rows_total,
                         rw1, rb1, rw2, rb2, rw3, rb3)
    return slab.astype(param_dtype), layout


def unpack_params(slab, layout):
    s = slab.astype(jnp.float32)
    S, A = layout.state_dim, layout.action_dim
    w1 = s[layout.rw1:layout.rw1 + S, 0:H1]
    b1 = s[layout.rb1, 0:H1]
    w2 = s[layout.rw2:layout.rw2 + H1, 0:H2]
    b2 = s[layout.rb2, 0:H2]
    w3 = s[layout.rw3:layout.rw3 + H2, 0:A]
    b3 = s[layout.rb3, 0:A]
    return w1, b1, w2, b2, w3, b3


def make_dqn_kernel(layout: ParamLayout):
    S, AP = layout.state_dim, layout.a_pad
    rw1, rb1, rw2, rb2, rw3, rb3 = (layout.rw1, layout.rb1, layout.rw2,
                                    layout.rb2, layout.rw3, layout.rb3)

    def kernel(x_ref, p_ref, o_ref):
        # bf16 weight slices feed the MXU directly (f32 accumulation); only the
        # biases are promoted, for the f32 bias-add on the accumulator.
        w1 = p_ref[rw1:rw1 + S, 0:H1]
        w2 = p_ref[rw2:rw2 + H1, 0:H2]
        w3 = p_ref[rw3:rw3 + H2, 0:AP]
        b1 = p_ref[rb1:rb1 + 1, 0:H1].astype(jnp.float32)
        b2 = p_ref[rb2:rb2 + 1, 0:H2].astype(jnp.float32)
        b3 = p_ref[rb3:rb3 + 1, 0:AP].astype(jnp.float32)

        x = x_ref[...]                                                # bf16
        h1 = jnp.maximum(
            jnp.dot(x, w1, preferred_element_type=jnp.float32) + b1, 0.0)
        h1 = h1.astype(jnp.bfloat16)
        h2 = jnp.maximum(
            jnp.dot(h1, w2, preferred_element_type=jnp.float32) + b2, 0.0)
        h2 = h2.astype(jnp.bfloat16)
        out = jnp.dot(h2, w3, preferred_element_type=jnp.float32) + b3
        o_ref[...] = out.astype(o_ref.dtype)   # lane-dense bf16 (tile_b, 128) store

    return kernel


def dqn_forward(x, slab, layout: ParamLayout, tile_b: int = 2048):
    """Fused DQN MLP forward. x: (B, state_dim) f32. Returns (B, action_dim) f32."""
    B, S = x.shape
    assert S == layout.state_dim
    AP = layout.a_pad

    # Batch tile: multiple of 16 (bf16 sublane tile), capped at ceil(B/2) so we
    # get >= 2 grid steps whenever B > 16 (lets both v7x TensorCores work), and
    # at most `tile_b` (default 2048: ~0.5 MiB bf16 out tile, well inside VMEM).
    half = _round_up(-(-B // 2), 16)
    eff_tile = max(16, min(tile_b, half))
    b_pad = _round_up(B, eff_tile)
    nb = b_pad // eff_tile

    x = x.astype(jnp.bfloat16)                      # MXU operand; halves x DMA
    if b_pad != B:
        x = jnp.pad(x, ((0, b_pad - B), (0, 0)))

    A = layout.action_dim
    flops = 2 * b_pad * (S * H1 + H1 * H2 + H2 * A)
    bytes_accessed = (x.size * x.dtype.itemsize
                      + slab.size * slab.dtype.itemsize
                      + b_pad * AP * 2)             # bf16 output writeback

    out = pl.pallas_call(
        make_dqn_kernel(layout),
        out_shape=jax.ShapeDtypeStruct((b_pad, AP), jnp.bfloat16),
        grid=(nb,),
        in_specs=[
            pl.BlockSpec((eff_tile, S), lambda i: (i, 0)),                     # x tile
            pl.BlockSpec((layout.rows_total, layout.cols), lambda i: (0, 0)),  # params (resident)
        ],
        out_specs=pl.BlockSpec((eff_tile, AP), lambda i: (i, 0)),
        compiler_params=pltpu.CompilerParams(
            dimension_semantics=("parallel",)),  # shard batch axis across TCs on v7x
        cost_estimate=pl.CostEstimate(flops=flops, transcendentals=0,
                                      bytes_accessed=bytes_accessed),
    )(x, slab)
    return out[:B, :A].astype(jnp.float32)


def dqn_reference(x, slab, layout):
    """Pure-JAX reference mimicking the kernel's arithmetic (bf16 MXU operands,
    f32 accumulation / bias / ReLU)."""
    w1, b1, w2, b2, w3, b3 = unpack_params(slab, layout)

    def lin(a, w, b):
        return jnp.dot(a.astype(jnp.bfloat16), w.astype(jnp.bfloat16),
                       preferred_element_type=jnp.float32) + b

    h = jnp.maximum(lin(x, w1, b1), 0.0)
    h = jnp.maximum(lin(h, w2, b2), 0.0)
    return lin(h, w3, b3)


if __name__ == "__main__":
    state_dim, action_dim, batch = 16, 8, 40
    key = jax.random.PRNGKey(0)
    kx, kp = jax.random.split(key)
    x = jax.random.normal(kx, (batch, state_dim), jnp.float32)

    raw_params = init_dqn_params(kp, state_dim, action_dim)
    slab, layout = pack_params(raw_params, state_dim, action_dim,
                               param_dtype=jnp.bfloat16)

    # At batch=40 the tile clamp yields eff_tile=32 -> grid=(2,), exercising both
    # the batch grid and megacore sharding.
    out = dqn_forward(x, slab, layout)
    out = jax.block_until_ready(out)

    ref = dqn_reference(x, slab, layout)
    assert out.shape == (batch, action_dim)
    # Kernel stores the padded output in bf16; allow bf16 rounding of O(1) Q-values.
    assert jnp.allclose(out, ref, atol=1e-2, rtol=1e-2), jnp.max(jnp.abs(out - ref))
    print("KERNEL_OK")
</pallas_src>

<mosaic_0001>
module attributes {stable_mosaic.version = 11 : i64} {
  func.func @kernel(%arg0: i32, %arg1: memref<32x16xbf16, #tpu.memory_space<vmem>>, %arg2: memref<160x128xbf16, #tpu.memory_space<vmem>>, %arg3: memref<32x128xbf16, #tpu.memory_space<vmem>>) attributes {dimension_semantics = [#tpu.dimension_semantics<parallel>], iteration_bounds = array<i64: 2>, scalar_prefetch = 0 : i64, scratch_operands = 0 : i64, tpu.core_type = #tpu.core_type<tc>, window_params = [{transform_indices = @transform_0, window_bounds = array<i64: 32, 16>}, {pipeline_mode = #tpu.pipeline_mode<synchronous>, transform_indices = @transform_1, window_bounds = array<i64: 160, 128>}, {transform_indices = @transform_2, window_bounds = array<i64: 32, 128>}]} {
    %c0 = arith.constant 0 : index
    %c0_0 = arith.constant 0 : index
    %0 = vector.load %arg2[%c0, %c0_0] : memref<160x128xbf16, #tpu.memory_space<vmem>>, vector<16x64xbf16>
    %c32 = arith.constant 32 : index
    %c0_1 = arith.constant 0 : index
    %1 = vector.load %arg2[%c32, %c0_1] : memref<160x128xbf16, #tpu.memory_space<vmem>>, vector<64x32xbf16>
    %c112 = arith.constant 112 : index
    %c0_2 = arith.constant 0 : index
    %2 = vector.load %arg2[%c112, %c0_2] : memref<160x128xbf16, #tpu.memory_space<vmem>>, vector<32x128xbf16>
    %c16 = arith.constant 16 : index
    %c0_3 = arith.constant 0 : index
    %3 = vector.load %arg2[%c16, %c0_3] : memref<160x128xbf16, #tpu.memory_space<vmem>>, vector<1x64xbf16>
    %4 = arith.extf %3 : vector<1x64xbf16> to vector<1x64xf32>
    %c96 = arith.constant 96 : index
    %c0_4 = arith.constant 0 : index
    %5 = vector.load %arg2[%c96, %c0_4] : memref<160x128xbf16, #tpu.memory_space<vmem>>, vector<1x32xbf16>
    %6 = arith.extf %5 : vector<1x32xbf16> to vector<1x32xf32>
    %c144 = arith.constant 144 : index
    %c0_5 = arith.constant 0 : index
    %7 = vector.load %arg2[%c144, %c0_5] : memref<160x128xbf16, #tpu.memory_space<vmem>>, vector<1x128xbf16>
    %8 = arith.extf %7 : vector<1x128xbf16> to vector<1x128xf32>
    %c0_6 = arith.constant 0 : index
    %c0_7 = arith.constant 0 : index
    %9 = vector.load %arg1[%c0_6, %c0_7] : memref<32x16xbf16, #tpu.memory_space<vmem>>, vector<32x16xbf16>
    %cst = arith.constant dense<0.000000e+00> : vector<32x64xf32>
    %10 = tpu.matmul %9, %0, %cst {dimension_numbers = #tpu.dot_dimension_numbers<[1], [0], [0], [1], [0, 0, 1, 1], [], []>} : vector<32x16xbf16>, vector<16x64xbf16>, vector<32x64xf32> -> vector<32x64xf32>
    %11 = vector.broadcast %4 : vector<1x64xf32> to vector<32x64xf32>
    %12 = arith.addf %10, %11 : vector<32x64xf32>
    %cst_8 = arith.constant 0.000000e+00 : f32
    %13 = vector.broadcast %cst_8 : f32 to vector<32x64xf32>
    %14 = arith.maximumf %12, %13 : vector<32x64xf32>
    %15 = arith.truncf %14 : vector<32x64xf32> to vector<32x64xbf16>
    %cst_9 = arith.constant dense<0.000000e+00> : vector<32x32xf32>
    %16 = tpu.matmul %15, %1, %cst_9 {dimension_numbers = #tpu.dot_dimension_numbers<[1], [0], [0], [1], [0, 0, 1, 1], [], []>} : vector<32x64xbf16>, vector<64x32xbf16>, vector<32x32xf32> -> vector<32x32xf32>
    %17 = vector.broadcast %6 : vector<1x32xf32> to vector<32x32xf32>
    %18 = arith.addf %16, %17 : vector<32x32xf32>
    %cst_10 = arith.constant 0.000000e+00 : f32
    %19 = vector.broadcast %cst_10 : f32 to vector<32x32xf32>
    %20 = arith.maximumf %18, %19 : vector<32x32xf32>
    %21 = arith.truncf %20 : vector<32x32xf32> to vector<32x32xbf16>
    %cst_11 = arith.constant dense<0.000000e+00> : vector<32x128xf32>
    %22 = tpu.matmul %21, %2, %cst_11 {dimension_numbers = #tpu.dot_dimension_numbers<[1], [0], [0], [1], [0, 0, 1, 1], [], []>} : vector<32x32xbf16>, vector<32x128xbf16>, vector<32x128xf32> -> vector<32x128xf32>
    %23 = vector.broadcast %8 : vector<1x128xf32> to vector<32x128xf32>
    %24 = arith.addf %22, %23 : vector<32x128xf32>
    %25 = arith.truncf %24 : vector<32x128xf32> to vector<32x128xbf16>
    %c0_12 = arith.constant 0 : index
    %c0_13 = arith.constant 0 : index
    %26 = vector.load %arg3[%c0_12, %c0_13] : memref<32x128xbf16, #tpu.memory_space<vmem>>, vector<32x128xbf16>
    tpu.vector_store %arg3[%c0_12, %c0_13], %25 {strides = array<i32>} : memref<32x128xbf16, #tpu.memory_space<vmem>>, vector<32x128xbf16>,
    return
  }
  func.func @transform_0(%arg0: i32) -> (i32, i32) {
    %c0_i32 = arith.constant 0 : i32
    %c0_i32_0 = arith.constant 0 : i32
    return %arg0, %c0_i32 : i32, i32
  }
  func.func @transform_1(%arg0: i32) -> (i32, i32) {
    %c0_i32 = arith.constant 0 : i32
    %c0_i32_0 = arith.constant 0 : i32
    %c0_i32_1 = arith.constant 0 : i32
    return %c0_i32, %c0_i32_0 : i32, i32
  }
  func.func @transform_2(%arg0: i32) -> (i32, i32) {
    %c0_i32 = arith.constant 0 : i32
    %c0_i32_0 = arith.constant 0 : i32
    return %arg0, %c0_i32 : i32, i32
  }
}

</mosaic_0001>

<llo_original>
// kernel: tpu_custom_call.1
$region0: #{tpu_custom_call.1}
  #allocation0 [shape = 'u32[]', space=smem, size = 0x4, offset = 0x4, fixed_abs, tag = 'smem constant byte address 0x4 - core index']
  #allocation1 [shape = 'u32[144,128]{1,0:T(1,128)}', space=vmem, size = 0x12000, scoped, tag = 'internal scratch']
  %s0 = inlined_call_operand.vmem [shape: bf16[64,16], index: 0, kind: input, shape index: {}]
  %s1 = inlined_call_operand.hbm [shape: bf16[160,128], index: 1, kind: input, shape index: {}]
  %s2 = inlined_call_operand.hbm [shape: bf16[64,128], index: 2, kind: output, shape index: {}]
  %s3 = sld [smem:[#allocation0]]
  $region45: #{tpu_custom_call.1} parent=0
    _
  %s5 = ssub.s32 1, %s3
  %s6 = scalar_select 0, %s5, %s3
  $region1: #{tpu_custom_call.1} parent=0
    #allocation2 [shape = 'u8[40960]{0}', space=vmem, size = 0xa000, scoped, tag = 'input window, operand 1, single buffered']
    #allocation3 [shape = 's32[2]{0}', space=sflag, size = 0x8, scoped, tag = 'scoped memory for tpu_custom_call.1']
    #allocation4 [shape = 's32[2]{0}', space=sflag, size = 0x8, scoped, tag = 'scoped memory for tpu_custom_call.1']
    #allocation5 [shape = 'u8[16384]{0}', space=vmem, size = 0x4000, scoped, tag = 'output window, operand 0']
    %7 = vsyncpa [#allocation3], 0
    %8 = vsyncpa [#allocation4], 0
    %s9 = scalar_lea.sflag [#allocation4], 1
    %10 = vsyncpa %s9, 0
    loop: start=0, step=1, limit=4
    $region2: #{tpu_custom_call.1} parent=1 // loop_pre_header
      _
    $region3: #{tpu_custom_call.1} parent=1 // loop_header
      %s12 = sphi 0, %s16
      %p13 = scmp.ge.s32.totalorder %s12, 4
      %s22 = sphi 0, %s24
      %s25 = sphi 0, %s22
      %s26 = sphi 0, %s25
      %s42 = sphi 0, %s26
      %s46 = sphi 0, %s46
      %s48 = sphi 0, %s46
      %s49 = sphi 0, %s48
      %s63 = sphi 0, %s49
      %s69 = sphi 0, %s71
      %s72 = sphi 0, %s69
      %s73 = sphi 0, %s72
      %s89 = sphi 0, %s73
    $region4: #{tpu_custom_call.1} parent=1 // loop_header_branch
      %15 = sbr.rel (%p13) target = $region8
    $region5: #{tpu_custom_call.1} parent=1 // loop_body
      %s17 = ssub.s32 %s12, 1
      %s18 = ssub.s32 %s12, 2
      %s19 = sadd.s32 %s12, 1
      %s20 = ssub.s32 %s12, %s19
      %p21 = scmp.eq.s32.totalorder %s20, 0
      %s23 = sadd.s32 %s22, 1
      %s24 = scalar_select %p21, %s22, %s23
      %p27 = pneg %p21
      %p28 = scmp.eq.s32.totalorder %s12, 1
      %p29 = por %p27, %p28
      %p30 = scmp.ne.s32.totalorder %s22, %s25
      %p31 = scmp.eq.s32.totalorder %s12, 0
      %p32 = por %p30, %p31
      %p33 = scmp.ne.s32.totalorder %s22, %s25
      %p34 = scmp.eq.s32.totalorder %s17, 1
      %p35 = por %p33, %p34
      %p36 = scmp.ne.s32.totalorder %s25, %s26
      %p37 = scmp.eq.s32.totalorder %s17, 0
      %p38 = por %p36, %p37
      %p39 = scmp.ne.s32.totalorder %s25, %s26
      %p40 = scmp.eq.s32.totalorder %s18, 1
      %p41 = por %p39, %p40
      %p43 = scmp.ne.s32.totalorder %s26, %s42
      %p44 = scmp.eq.s32.totalorder %s18, 0
      %p45 = por %p43, %p44
      %s47 = sadd.s32 %s46, 1
      %p50 = scmp.eq.s32.totalorder %s12, 1
      %p51 = scmp.ne.s32.totalorder %s46, %s48
      %p52 = scmp.eq.s32.totalorder %s12, 0
      %p53 = por %p51, %p52
      %p54 = scmp.ne.s32.totalorder %s46, %s48
      %p55 = scmp.eq.s32.totalorder %s17, 1
      %p56 = por %p54, %p55
      %p57 = scmp.ne.s32.totalorder %s48, %s49
      %p58 = scmp.eq.s32.totalorder %s17, 0
      %p59 = por %p57, %p58
      %p60 = scmp.ne.s32.totalorder %s48, %s49
      %p61 = scmp.eq.s32.totalorder %s18, 1
      %p62 = por %p60, %p61
      %p64 = scmp.ne.s32.totalorder %s49, %s63
      %p65 = scmp.eq.s32.totalorder %s18, 0
      %p66 = por %p64, %p65
      %s67 = ssub.s32 %s12, %s19
      %p68 = scmp.eq.s32.totalorder %s67, 0
      %s70 = sadd.s32 %s69, 1
      %s71 = scalar_select %p68, %s69, %s70
      %p74 = pneg %p68
      %p75 = scmp.eq.s32.totalorder %s12, 1
      %p76 = por %p74, %p75
      %p77 = scmp.ne.s32.totalorder %s69, %s72
      %p78 = scmp.eq.s32.totalorder %s12, 0
      %p79 = por %p77, %p78
      %p80 = scmp.ne.s32.totalorder %s69, %s72
      %p81 = scmp.eq.s32.totalorder %s17, 1
      %p82 = por %p80, %p81
      %p83 = scmp.ne.s32.totalorder %s72, %s73
      %p84 = scmp.eq.s32.totalorder %s17, 0
      %p85 = por %p83, %p84
      %p86 = scmp.ne.s32.totalorder %s72, %s73
      %p87 = scmp.eq.s32.totalorder %s18, 1
      %p88 = por %p86, %p87
      %p90 = scmp.ne.s32.totalorder %s73, %s89
      %p91 = scmp.eq.s32.totalorder %s18, 0
      %p92 = por %p90, %p91
      %p93 = scmp.le.s32.totalorder 1, %s12
      %p94 = scmp.lt.s32.totalorder %s12, 3
      %p95 = pnand %p93, %p94
      %p96 = pneg %p95
      // Predicated region
      $region9: #{tpu_custom_call.1} parent=5 // pred_check
        _
      $region10: #{tpu_custom_call.1} parent=5 // pred_check_branch
        %98 = sbr.rel (%p95) target = $region12
      $region11: #{tpu_custom_call.1} parent=5 // pred_region
        %s99 = ssub.s32 %s12, 1
        // Predicated region
        $region13: #{tpu_custom_call.1} parent=11 // pred_check
          %p100 = pneg %p59
        $region14: #{tpu_custom_call.1} parent=11 // pred_check_branch
          %102 = sbr.rel (%p100) target = $region16
        $region15: #{tpu_custom_call.1} parent=11 // pred_region
          %s104 = ssub.s32 1280, 1280
          %105 = vsyncadd [#allocation3], %s104
          %s106 = sshll.u32 [#allocation2], 4
          %s107 = int_to_ptr.vmem [resolvable:$true] %s106
          %112 = dma.hbm_to_vmem [thread:$0]  %s1, 1280, %s107, [#allocation3], 64, 64, 4
        $region16: #{tpu_custom_call.1} parent=11 // pred_fallthru
          _
      $region12: #{tpu_custom_call.1} parent=5 // pred_fallthru
        _
      %p113 = scmp.lt.s32.totalorder %s12, 2
      // Predicated region
      $region17: #{tpu_custom_call.1} parent=5 // pred_check
        %p114 = pneg %p113
      $region18: #{tpu_custom_call.1} parent=5 // pred_check_branch
        %116 = sbr.rel (%p114) target = $region20
      $region19: #{tpu_custom_call.1} parent=5 // pred_region
        // Predicated region
        $region21: #{tpu_custom_call.1} parent=19 // pred_check
          %p117 = pneg %p32
        $region22: #{tpu_custom_call.1} parent=19 // pred_check_branch
          %119 = sbr.rel (%p117) target = $region24
        $region23: #{tpu_custom_call.1} parent=19 // pred_region
          %s120 = smul.u32 4, %s12
          %p121 = scmp.lt.s32.totalorder %s120, 7
          %s122 = scalar_select %p121, %s120, 7
          %s123 = smul.addr %s122, 4
          %s124 = scalar_lea.vmem %s0, %s123
          %s125 = smul.u32 4, %s12
        $region24: #{tpu_custom_call.1} parent=19 // pred_fallthru
          _
      $region20: #{tpu_custom_call.1} parent=5 // pred_fallthru
        _
      %p126 = scmp.le.s32.totalorder 1, %s12
      %p127 = scmp.lt.s32.totalorder %s12, 3
      %p128 = pnand %p126, %p127
      %p129 = pneg %p128
      // Predicated region
      $region25: #{tpu_custom_call.1} parent=5 // pred_check
        _
      $region26: #{tpu_custom_call.1} parent=5 // pred_check_branch
        %131 = sbr.rel (%p128) target = $region28
      $region27: #{tpu_custom_call.1} parent=5 // pred_region
        %s132 = ssub.s32 %s12, 1
        // Predicated region
        $region29: #{tpu_custom_call.1} parent=27 // pred_check
          %p133 = pneg %p59
        $region30: #{tpu_custom_call.1} parent=27 // pred_check_branch
          %135 = sbr.rel (%p133) target = $region32
        $region31: #{tpu_custom_call.1} parent=27 // pred_region
          %136 = dma.done [#allocation3], 1280
        $region32: #{tpu_custom_call.1} parent=27 // pred_fallthru
          _
        %s137 = smul.u32 4, %s17
        %p138 = scmp.lt.s32.totalorder %s137, 7
        %s139 = scalar_select %p138, %s137, 7
        %s140 = smul.addr %s139, 4
        %s141 = scalar_lea.vmem %s0, %s140
        %p142 = pneg %p38
        %p143 = pneg %p35
        %p144 = pneg %p59
        %p145 = pneg %p56
        %p146 = pneg %p85
        %p147 = pneg %p82
        %s148 = sand.u32 %s72, 1
        %s149 = scalar_lea.sflag [#allocation4], %s148
        %s150 = sand.u32 %s72, 1
        %s151 = smul.addr %s150, 16
        %s152 = scalar_lea.vmem [#allocation5], %s151
        %s153 = smul.u32 4, %s17
        %p154 = scmp.lt.s32.totalorder %s153, 7
        %s155 = scalar_select %p154, %s153, 7
        %s156 = smul.addr %s155, 4
        %s157 = scalar_lea.vmem %s0, %s156
        %s158 = smul.u32 4, %s17
        %s159 = smul.u32 4, %s17
        %v161 = vld [vmem:[#allocation2] sm:$0xf]
        %v162 = vld [vmem:[#allocation2 + $0x4] sm:$0xf]
        %v163 = vld [vmem:[#allocation2 + $0x10] sm:$0xf]
        %v164 = vld [vmem:[#allocation2 + $0x14] sm:$0xf]
        %v165 = vld [vmem:[#allocation2 + $0x18] sm:$0xf]
        %v166 = vld [vmem:[#allocation2 + $0x1c] sm:$0xf]
        %v167 = vld [vmem:[#allocation2 + $0x20] sm:$0xf]
        %v168 = vld [vmem:[#allocation2 + $0x24] sm:$0xf]
        %v169 = vld [vmem:[#allocation2 + $0x28] sm:$0xf]
        %v170 = vld [vmem:[#allocation2 + $0x2c] sm:$0xf]
        %v171 = vld [vmem:[#allocation2 + $0x38] sm:$0xf]
        %v172 = vld [vmem:[#allocation2 + $0x3c] sm:$0xf]
        %v173 = vld [vmem:[#allocation2 + $0x40] sm:$0xf]
        %v174 = vld [vmem:[#allocation2 + $0x44] sm:$0xf]
        %v175 = vld [vmem:[#allocation2 + $0x8] sm:$0x1]
        %v176 = vunpack.c.l.bf16 %v175
        %v177 = vld [vmem:[#allocation2 + $0x30] sm:$0x1]
        %v178 = vunpack.c.l.bf16 %v177
        %v179 = vld [vmem:[#allocation2 + $0x48] sm:$0x1]
        %v180 = vunpack.c.l.bf16 %v179
        %v181 = vld [vmem:[%s157] sm:$0xf]
        %v182 = vld [vmem:[%s157 + $0x4] sm:$0xf]
        %v183 = vld [vmem:[%s157 + $0x8] sm:$0xf]
        %v184 = vld [vmem:[%s157 + $0xc] sm:$0xf]
        %v185 = vlaneseq
        %v186 = vshrl.u32 %v185, 7
        %v187 = vsub.s32 0, %v186
        %v188 = vrot.slane %v176, %v187
        %v193 = vunpack.c.l.b16 %v181
        %v194 = vunpack.c.l.b16 %v182
        %v195 = vunpack.c.l.b16 %v183
        %v196 = vunpack.c.l.b16 %v184
        %v197 = vpack.c.b16 %v194, %v193
        %v198 = vpack.c.b16 %v196, %v195
        %v201 = vunpack.c.l.b16 %v161
        %v202 = vunpack.c.l.b16 %v162
        %v203 = vpack.c.b16 %v202, %v201
        %vm205 = vcmask 130048
        %v207 = vsel %vm205, %v197, 0
        %v210 = vsel %vm205, %v198, 0
        %212 = vmatprep.subr.bf16.mxu0 0
        %213 = vmatpush1.bf16.msra.mxu0 %v203
        %214 = vmatprep.subr.bf16.mxu0 0
        %215 = vmatpush1.bf16.msra.mxu0 0
        %216 = vmatprep.subr.bf16.mxu0 0
        %217 = vmatpush1.bf16.msra.mxu0 0
        %218 = vmatprep.subr.bf16.mxu0 0
        %219 = vmatpush1.bf16.msra.mxu0 0
        %220 = vmatprep.subr.bf16.mxu0 0
        %221 = vmatpush1.bf16.msra.mxu0 0
        %222 = vmatprep.subr.bf16.mxu0 0
        %223 = vmatpush1.bf16.msra.mxu0 0
        %224 = vmatprep.subr.bf16.mxu0 0
        %225 = vmatpush1.bf16.msra.mxu0 0
        %226 = vmatprep.subr.bf16.mxu0 0
        %227 = vmatpush1.bf16.msra.mxu0 0
        %228 = vmatprep.subr.bf16.mxu0 0
        %229 = vmatpush1.bf16.msra.mxu0 0
        %230 = vmatprep.subr.bf16.mxu0 0
        %231 = vmatpush1.bf16.msra.mxu0 0
        %232 = vmatprep.subr.bf16.mxu0 0
        %233 = vmatpush1.bf16.msra.mxu0 0
        %234 = vmatprep.subr.bf16.mxu0 0
        %235 = vmatpush1.bf16.msra.mxu0 0
        %236 = vmatprep.subr.bf16.mxu0 0
        %237 = vmatpush1.bf16.msra.mxu0 0
        %238 = vmatprep.subr.bf16.mxu0 0
        %239 = vmatpush1.bf16.msra.mxu0 0
        %240 = vmatprep.subr.bf16.mxu0 0
        %241 = vmatpush1.bf16.msra.mxu0 0
        %242 = vmatprep.subr.bf16.mxu0 0
        %243 = vmatpush1.bf16.msra.mxu0 0
        %244 = vmatprep.mubr.bf16.mxu0 0
        %245 = vmatmul.mubr.bf16.gmra.mrb[0].mxu0 %v207
        %v246 = vpop.f32.mrb[0].mxu0
        %v247 = vadd.f32 %v188, %v246
        %v248 = vpop.f32.mrb[0].mxu0
        %v249 = vpop.f32.mrb[0].mxu0
        %v250 = vadd.f32 %v188, %v249
        %v251 = vpop.f32.mrb[0].mxu0
        %252 = vmatprep.mubr.bf16.mxu0 0
        %253 = vmatmul.mubr.bf16.gmra.mrb[0].mxu0 %v210
        %v254 = vpop.f32.mrb[0].mxu0
        %v255 = vadd.f32 %v188, %v254
        %v256 = vpop.f32.mrb[0].mxu0
        %v257 = vpop.f32.mrb[0].mxu0
        %v258 = vadd.f32 %v188, %v257
        %v259 = vpop.f32.mrb[0].mxu0
        %260 = vdwg.mxu0
        %v261 = vmax.f32 %v247, 0.0
        %v262 = vmax.f32 %v250, 0.0
        %v263 = vmax.f32 %v255, 0.0
        %v264 = vmax.f32 %v258, 0.0
        %v265 = vpack.c.bf16 %v262, %v261
        %v266 = vpack.c.bf16 %v264, %v263
        %v267 = vlaneseq
        %v268 = vshrl.u32 %v267, 7
        %v269 = vsub.s32 0, %v268
        %v270 = vrot.slane %v178, %v269
        %v279 = vunpack.c.l.b16 %v163
        %v280 = vunpack.c.l.b16 %v164
        %v281 = vunpack.c.l.b16 %v165
        %v282 = vunpack.c.l.b16 %v166
        %v283 = vunpack.c.l.b16 %v167
        %v284 = vunpack.c.l.b16 %v168
        %v285 = vunpack.c.l.b16 %v169
        %v286 = vunpack.c.l.b16 %v170
        %v287 = vpack.c.b16 %v280, %v279
        %v288 = vpack.c.b16 %v282, %v281
        %v289 = vpack.c.b16 %v284, %v283
        %v290 = vpack.c.b16 %v286, %v285
        %vm295 = vcmask 523264
        %v297 = vsel %vm295, %v265, 0
        %v300 = vsel %vm295, %v266, 0
        %302 = vmatprep.subr.bf16.mxu0 0
        %303 = vmatpush1.bf16.msra.mxu0 %v287
        %304 = vmatprep.subr.bf16.mxu0 0
        %305 = vmatpush1.bf16.msra.mxu0 %v288
        %306 = vmatprep.subr.bf16.mxu0 0
        %307 = vmatpush1.bf16.msra.mxu0 %v289
        %308 = vmatprep.subr.bf16.mxu0 0
        %309 = vmatpush1.bf16.msra.mxu0 %v290
        %310 = vmatprep.subr.bf16.mxu0 0
        %311 = vmatpush1.bf16.msra.mxu0 0
        %312 = vmatprep.subr.bf16.mxu0 0
        %313 = vmatpush1.bf16.msra.mxu0 0
        %314 = vmatprep.subr.bf16.mxu0 0
        %315 = vmatpush1.bf16.msra.mxu0 0
        %316 = vmatprep.subr.bf16.mxu0 0
        %317 = vmatpush1.bf16.msra.mxu0 0
        %318 = vmatprep.subr.bf16.mxu0 0
        %319 = vmatpush1.bf16.msra.mxu0 0
        %320 = vmatprep.subr.bf16.mxu0 0
        %321 = vmatpush1.bf16.msra.mxu0 0
        %322 = vmatprep.subr.bf16.mxu0 0
        %323 = vmatpush1.bf16.msra.mxu0 0
        %324 = vmatprep.subr.bf16.mxu0 0
        %325 = vmatpush1.bf16.msra.mxu0 0
        %326 = vmatprep.subr.bf16.mxu0 0
        %327 = vmatpush1.bf16.msra.mxu0 0
        %328 = vmatprep.subr.bf16.mxu0 0
        %329 = vmatpush1.bf16.msra.mxu0 0
        %330 = vmatprep.subr.bf16.mxu0 0
        %331 = vmatpush1.bf16.msra.mxu0 0
        %332 = vmatprep.subr.bf16.mxu0 0
        %333 = vmatpush1.bf16.msra.mxu0 0
        %334 = vmatprep.mubr.bf16.mxu0 0
        %335 = vmatmul.mubr.bf16.gmra.mrb[0].mxu0 %v297
        %v336 = vpop.f32.mrb[0].mxu0
        %v337 = vadd.f32 %v270, %v336
        %v338 = vpop.f32.mrb[0].mxu0
        %v339 = vpop.f32.mrb[0].mxu0
        %v340 = vadd.f32 %v270, %v339
        %v341 = vpop.f32.mrb[0].mxu0
        %342 = vmatprep.mubr.bf16.mxu0 0
        %343 = vmatmul.mubr.bf16.gmra.mrb[0].mxu0 %v300
        %v344 = vpop.f32.mrb[0].mxu0
        %v345 = vadd.f32 %v270, %v344
        %v346 = vpop.f32.mrb[0].mxu0
        %v347 = vpop.f32.mrb[0].mxu0
        %v348 = vadd.f32 %v270, %v347
        %v349 = vpop.f32.mrb[0].mxu0
        %350 = vdwg.mxu0
        %v351 = vmax.f32 %v337, 0.0
        %v352 = vmax.f32 %v340, 0.0
        %v353 = vmax.f32 %v345, 0.0
        %v354 = vmax.f32 %v348, 0.0
        %v355 = vpack.c.bf16 %v352, %v351
        %v356 = vpack.c.bf16 %v354, %v353
        %v357 = vlaneseq
        %v358 = vshrl.u32 %v357, 7
        %v359 = vsub.s32 0, %v358
        %v360 = vrot.slane %v180, %v359
        %v365 = vunpack.c.l.b16 %v171
        %v366 = vunpack.c.l.b16 %v172
        %v367 = vunpack.c.l.b16 %v173
        %v368 = vunpack.c.l.b16 %v174
        %v369 = vpack.c.b16 %v366, %v365
        %v370 = vpack.c.b16 %v368, %v367
        %vm373 = vcmask 261120
        %v375 = vsel %vm373, %v355, 0
        %v378 = vsel %vm373, %v356, 0
        %380 = vmatprep.subr.bf16.mxu0 0
        %381 = vmatpush1.bf16.msra.mxu0 %v369
        %382 = vmatprep.subr.bf16.mxu0 0
        %383 = vmatpush1.bf16.msra.mxu0 %v370
        %384 = vmatprep.subr.bf16.mxu0 0
        %385 = vmatpush1.bf16.msra.mxu0 0
        %386 = vmatprep.subr.bf16.mxu0 0
        %387 = vmatpush1.bf16.msra.mxu0 0
        %388 = vmatprep.subr.bf16.mxu0 0
        %389 = vmatpush1.bf16.msra.mxu0 0
        %390 = vmatprep.subr.bf16.mxu0 0
        %391 = vmatpush1.bf16.msra.mxu0 0
        %392 = vmatprep.subr.bf16.mxu0 0
        %393 = vmatpush1.bf16.msra.mxu0 0
        %394 = vmatprep.subr.bf16.mxu0 0
        %395 = vmatpush1.bf16.msra.mxu0 0
        %396 = vmatprep.subr.bf16.mxu0 0
        %397 = vmatpush1.bf16.msra.mxu0 0
        %398 = vmatprep.subr.bf16.mxu0 0
        %399 = vmatpush1.bf16.msra.mxu0 0
        %400 = vmatprep.subr.bf16.mxu0 0
        %401 = vmatpush1.bf16.msra.mxu0 0
        %402 = vmatprep.subr.bf16.mxu0 0
        %403 = vmatpush1.bf16.msra.mxu0 0
        %404 = vmatprep.subr.bf16.mxu0 0
        %405 = vmatpush1.bf16.msra.mxu0 0
        %406 = vmatprep.subr.bf16.mxu0 0
        %407 = vmatpush1.bf16.msra.mxu0 0
        %408 = vmatprep.subr.bf16.mxu0 0
        %409 = vmatpush1.bf16.msra.mxu0 0
        %410 = vmatprep.subr.bf16.mxu0 0
        %411 = vmatpush1.bf16.msra.mxu0 0
        %412 = vmatprep.mubr.bf16.mxu0 0
        %413 = vmatmul.mubr.bf16.gmra.mrb[0].mxu0 %v375
        %v414 = vpop.f32.mrb[0].mxu0
        %v415 = vadd.f32 %v360, %v414
        %v416 = vpop.f32.mrb[0].mxu0
        %v417 = vpop.f32.mrb[0].mxu0
        %v418 = vadd.f32 %v360, %v417
        %v419 = vpop.f32.mrb[0].mxu0
        %420 = vmatprep.mubr.bf16.mxu0 0
        %421 = vmatmul.mubr.bf16.gmra.mrb[0].mxu0 %v378
        %v422 = vpop.f32.mrb[0].mxu0
        %v423 = vadd.f32 %v360, %v422
        %v424 = vpop.f32.mrb[0].mxu0
        %v425 = vpop.f32.mrb[0].mxu0
        %v426 = vadd.f32 %v360, %v425
        %v427 = vpop.f32.mrb[0].mxu0
        %428 = vdwg.mxu0
        %v429 = vpack.c.bf16 %v418, %v415
        %v430 = vpack.c.bf16 %v426, %v423
        %v433 = vunpack.c.l.b16 %v429
        %v434 = vunpack.c.h.b16 %v429
        %v435 = vunpack.c.l.b16 %v430
        %v436 = vunpack.c.h.b16 %v430
        %v437 = vpack.c.b16 %v433, %v433
        %v438 = vpack.c.b16 %v434, %v434
        %v439 = vpack.c.b16 %v435, %v435
        %v440 = vpack.c.b16 %v436, %v436
        %445 = vst [vmem:[%s152] sm:$0xf] %v437
        %446 = vst [vmem:[%s152 + $0x4] sm:$0xf] %v438
        %447 = vst [vmem:[%s152 + $0x8] sm:$0xf] %v439
        %448 = vst [vmem:[%s152 + $0xc] sm:$0xf] %v440
        %s449 = sand.u32 %s72, 1
        %s450 = scalar_lea.sflag [#allocation4], %s449
        %s451 = sand.u32 %s72, 1
        %s452 = smul.addr %s451, 16
        %s453 = scalar_lea.vmem [#allocation5], %s452
        // Predicated region
        $region33: #{tpu_custom_call.1} parent=27 // pred_check
          %p454 = pneg %p82
        $region34: #{tpu_custom_call.1} parent=27 // pred_check_branch
          %456 = sbr.rel (%p454) target = $region36
        $region35: #{tpu_custom_call.1} parent=27 // pred_region
          %s457 = smul.u32 4, %s17
          %s459 = ssub.s32 256, 256
          %460 = vsyncadd %s450, %s459
          %s461 = smul.addr %s457, 64
          %s462 = scalar_lea.hbm %s2, %s461
          %s463 = sshll.u32 %s453, 4
          %s464 = int_to_ptr.vmem [resolvable:$true] %s463
          %469 = dma.vmem_to_hbm [thread:$0]  %s464, 256, %s462, %s450, 64, 64, 4
        $region36: #{tpu_custom_call.1} parent=27 // pred_fallthru
          _
      $region28: #{tpu_custom_call.1} parent=5 // pred_fallthru
        _
      %p470 = scmp.le.s32.totalorder 2, %s12
      // Predicated region
      $region37: #{tpu_custom_call.1} parent=5 // pred_check
        %p471 = pneg %p470
      $region38: #{tpu_custom_call.1} parent=5 // pred_check_branch
        %473 = sbr.rel (%p471) target = $region40
      $region39: #{tpu_custom_call.1} parent=5 // pred_region
        %s474 = ssub.s32 %s12, 2
        // Predicated region
        $region41: #{tpu_custom_call.1} parent=39 // pred_check
          %p475 = pneg %p88
        $region42: #{tpu_custom_call.1} parent=39 // pred_check_branch
          %477 = sbr.rel (%p475) target = $region44
        $region43: #{tpu_custom_call.1} parent=39 // pred_region
          %s478 = sand.u32 %s73, 1
          %s479 = scalar_lea.sflag [#allocation4], %s478
          %s480 = sand.u32 %s73, 1
          %s481 = smul.addr %s480, 16
          %s482 = scalar_lea.vmem [#allocation5], %s481
          %483 = dma.done %s479, 256
        $region44: #{tpu_custom_call.1} parent=39 // pred_fallthru
          _
      $region40: #{tpu_custom_call.1} parent=5 // pred_fallthru
        _
    $region6: #{tpu_custom_call.1} parent=1 // loop_footer
      %s16 = sadd.s32 1, %s12
    $region7: #{tpu_custom_call.1} parent=1 // loop_footer_branch
      %11 = sbr.rel target = $region3
    $region8: #{tpu_custom_call.1} parent=1 // loop_exit
      _
    %484 = vsyncpa [#allocation3], 1
    %s485 = scalar_lea.sflag [#allocation3], 1
    %486 = vsyncpa %s485, 1
    %487 = vsyncpa [#allocation4], 1
    %s488 = scalar_lea.sflag [#allocation4], 1
    %489 = vsyncpa %s488, 1

</llo_original>
